<compile_context>
chip_gen: v5e
topology: v5e:2x2
jax: 0.10.0
libtpu: 0.0.40
codegen_flags: <defaults>
</compile_context>

<pallas_src>
import functools

import numpy as np
import jax
import jax.numpy as jnp
from jax.experimental import pallas as pl
from jax.experimental.pallas import tpu as pltpu

LANE = 128  # lane-dense output width: log-probs in lanes 0:A, value in lane A


# ----------------------------- Pallas kernel ------------------------------ #
def acmodel_kernel(n_actions, obs_ref, w1_ref, b1_ref, w2_ref, b2_ref, out_ref):
    obs = obs_ref[...]                                                  # (TB, D)

    # fused layer 1: [actor_hidden | critic_hidden] in one 128-wide matmul
    h = jnp.tanh(jnp.dot(obs, w1_ref[...],
                         preferred_element_type=jnp.float32)
                 + b1_ref[...])                                         # (TB, 128)

    # fused layer 2 (block-diagonal weight): logits in lanes 0:A, value in lane A
    z = jnp.dot(h, w2_ref[...],
                preferred_element_type=jnp.float32) + b2_ref[...]       # (TB, 128)

    lane = jax.lax.broadcasted_iota(jnp.int32, z.shape, dimension=1)
    is_logit = lane < n_actions

    # masked, numerically-stable log_softmax over the first A lanes only
    m = jnp.max(jnp.where(is_logit, z, -jnp.inf), axis=-1, keepdims=True)
    shifted = z - m
    expd = jnp.where(is_logit, jnp.exp(shifted), 0.0)
    lse = jnp.log(jnp.sum(expd, axis=-1, keepdims=True))
    logp = shifted - lse

    # lane A carries the critic value untouched; lanes 0:A carry log-probs.
    out_ref[...] = jnp.where(lane == n_actions, z, logp)


# ------------------------------- wrapper ----------------------------------- #
def acmodel_forward(obs, fused, n_actions):
    """Returns (log_probs (B, A), value (B,)) matching ACModel.forward
    (Categorical logits after log_softmax, and the squeezed critic value)."""
    B, D = obs.shape
    H2 = fused["w1"].shape[1]          # 2 * hidden (fused actor|critic width)

    # batch tile: >= 512 rows for real RL batches (amortizes ~0.35us/step grid
    # overhead), single step for tiny batches; always a multiple of 8.
    TB = 512 if B >= 512 else ((B + 7) // 8) * 8
    B_pad = ((B + TB - 1) // TB) * TB
    if B_pad != B:
        obs = jnp.pad(obs, ((0, B_pad - B), (0, 0)))

    cost = pl.CostEstimate(
        flops=2 * B_pad * (D * H2 + H2 * LANE),
        transcendentals=B_pad * (H2 + n_actions),
        bytes_accessed=4 * (B_pad * D + D * H2 + H2 * LANE + 2 * LANE
                            + B_pad * LANE),
    )

    out = pl.pallas_call(
        functools.partial(acmodel_kernel, n_actions),
        out_shape=jax.ShapeDtypeStruct((B_pad, LANE), jnp.float32),
        grid=(B_pad // TB,),
        in_specs=[
            pl.BlockSpec((TB, D), lambda i: (i, 0)),            # obs: streamed
            pl.BlockSpec(fused["w1"].shape, lambda i: (0, 0)),  # weights:
            pl.BlockSpec(fused["b1"].shape, lambda i: (0, 0)),  #   VMEM-resident
            pl.BlockSpec(fused["w2"].shape, lambda i: (0, 0)),  #   across grid
            pl.BlockSpec(fused["b2"].shape, lambda i: (0, 0)),
        ],
        out_specs=pl.BlockSpec((TB, LANE), lambda i: (i, 0)),
        compiler_params=pltpu.CompilerParams(
            dimension_semantics=("parallel",)),
        cost_estimate=cost,
    )(obs, fused["w1"], fused["b1"], fused["w2"], fused["b2"])

    log_probs = out[:B, :n_actions]
    value = out[:B, n_actions]
    return log_probs, value


# ----------------- host-side parameter fusion (done once) ------------------ #
def fuse_params(params):
    """Concatenate actor/critic layer-1 weights and build the block-diagonal
    layer-2 weight so the kernel needs only two matmuls and one output."""
    w1a, w1c = params["w1a"], params["w1c"]          # (D, H)
    D, H = w1a.shape
    A = params["w2a"].shape[1]
    assert A + 1 <= LANE and 2 * H == LANE

    w1 = jnp.concatenate([w1a, w1c], axis=1)                              # (D, 2H)
    b1 = jnp.concatenate([params["b1a"], params["b1c"]], axis=1)          # (1, 2H)

    w2 = jnp.zeros((2 * H, LANE), jnp.float32)
    w2 = w2.at[:H, :A].set(params["w2a"])            # actor head -> lanes 0:A
    w2 = w2.at[H:, A].set(params["w2c"][:, 0])       # critic head -> lane A

    b2 = jnp.zeros((1, LANE), jnp.float32)
    b2 = b2.at[:, :A].set(params["b2a"][0])
    b2 = b2.at[:, A].set(params["b2c"][0, 0])

    return {"w1": w1, "b1": b1, "w2": w2, "b2": b2}


# ---------------------- deterministic parameter init ----------------------- #
def _orthogonal(key, out_dim, in_dim, gain):
    """torch.nn.init.orthogonal_ equivalent on a (out, in) matrix."""
    n_rows, n_cols = out_dim, in_dim
    flat = jax.random.normal(key, (max(n_rows, n_cols), min(n_rows, n_cols)),
                             dtype=jnp.float32)
    q, r = jnp.linalg.qr(flat)
    q = q * jnp.sign(jnp.diag(r))
    if n_rows < n_cols:
        q = q.T
    return gain * q[:n_rows, :n_cols]


def init_acmodel_params(key, obs_dim, n_actions, hidden=64):
    gain_tanh = 5.0 / 3.0                  # nn.init.calculate_gain('tanh')
    k1, k2, k3, k4 = jax.random.split(key, 4)
    # PyTorch Linear weight is (out, in); store transposed (in, out) for x @ W.
    w1a = _orthogonal(k1, hidden, obs_dim, gain_tanh).T
    w2a = _orthogonal(k2, n_actions, hidden, gain_tanh).T
    w1c = _orthogonal(k3, hidden, obs_dim, gain_tanh).T
    w2c = _orthogonal(k4, 1, hidden, gain_tanh).T
    bias = lambda n: jnp.full((1, n), 1e-6, dtype=jnp.float32)
    return {
        "w1a": w1a, "b1a": bias(hidden),
        "w2a": w2a, "b2a": bias(n_actions),
        "w1c": w1c, "b1c": bias(hidden),
        "w2c": w2c, "b2c": bias(1),
    }


# --------------------------------- main ------------------------------------ #
if __name__ == "__main__":
    key = jax.random.PRNGKey(0)
    k_obs, k_par = jax.random.split(key)

    B, OBS_DIM, N_ACTIONS = 8, 16, 6
    obs = jax.random.normal(k_obs, (B, OBS_DIM), dtype=jnp.float32)
    params = init_acmodel_params(k_par, OBS_DIM, N_ACTIONS)
    fused = fuse_params(params)

    forward = jax.jit(acmodel_forward, static_argnums=(2,))
    log_probs, value = forward(obs, fused, N_ACTIONS)
    jax.block_until_ready((log_probs, value))

    # sanity: log_softmax rows sum to 1 in prob space; value is (B,)
    probs_sum = jnp.sum(jnp.exp(log_probs), axis=-1)
    assert log_probs.shape == (B, N_ACTIONS)
    assert value.shape == (B,)
    assert bool(jnp.all(jnp.abs(probs_sum - 1.0) < 1e-4))

    # pure-JAX reference check against the UNFUSED parameters
    def ref(obs, p):
        h = jnp.tanh(obs @ p["w1a"] + p["b1a"])
        logits = h @ p["w2a"] + p["b2a"]
        lp = jax.nn.log_softmax(logits, axis=1)
        hc = jnp.tanh(obs @ p["w1c"] + p["b1c"])
        v = (hc @ p["w2c"] + p["b2c"])[:, 0]
        return lp, v

    lp_ref, v_ref = ref(obs, params)
    np.testing.assert_allclose(np.asarray(log_probs), np.asarray(lp_ref),
                               rtol=1e-5, atol=1e-5)
    np.testing.assert_allclose(np.asarray(value), np.asarray(v_ref),
                               rtol=1e-5, atol=1e-5)

    # TODO(synk): Categorical.sample()/log_prob (get_action) is host-side RNG
    # sampling over the returned log-probs; not part of the kernel hot path.
    print("KERNEL_OK")
</pallas_src>

<mosaic_0001>
module attributes {stable_mosaic.version = 11 : i64} {
  func.func @acmodel_kernel(%arg0: i32, %arg1: memref<8x16xf32, #tpu.memory_space<vmem>>, %arg2: memref<16x128xf32, #tpu.memory_space<vmem>>, %arg3: memref<1x128xf32, #tpu.memory_space<vmem>>, %arg4: memref<128x128xf32, #tpu.memory_space<vmem>>, %arg5: memref<1x128xf32, #tpu.memory_space<vmem>>, %arg6: memref<8x128xf32, #tpu.memory_space<vmem>>) attributes {dimension_semantics = [#tpu.dimension_semantics<parallel>], iteration_bounds = array<i64: 1>, scalar_prefetch = 0 : i64, scratch_operands = 0 : i64, tpu.core_type = #tpu.core_type<tc>, window_params = [{transform_indices = @transform_0, window_bounds = array<i64: 8, 16>}, {pipeline_mode = #tpu.pipeline_mode<synchronous>, transform_indices = @transform_1, window_bounds = array<i64: 16, 128>}, {pipeline_mode = #tpu.pipeline_mode<synchronous>, transform_indices = @transform_2, window_bounds = array<i64: 1, 128>}, {pipeline_mode = #tpu.pipeline_mode<synchronous>, transform_indices = @transform_3, window_bounds = array<i64: 128, 128>}, {pipeline_mode = #tpu.pipeline_mode<synchronous>, transform_indices = @transform_4, window_bounds = array<i64: 1, 128>}, {transform_indices = @transform_5, window_bounds = array<i64: 8, 128>}]} {
    %c0 = arith.constant 0 : index
    %c0_0 = arith.constant 0 : index
    %0 = vector.load %arg1[%c0, %c0_0] : memref<8x16xf32, #tpu.memory_space<vmem>>, vector<8x16xf32>
    %c0_1 = arith.constant 0 : index
    %c0_2 = arith.constant 0 : index
    %1 = vector.load %arg2[%c0_1, %c0_2] : memref<16x128xf32, #tpu.memory_space<vmem>>, vector<16x128xf32>
    %cst = arith.constant dense<0.000000e+00> : vector<8x128xf32>
    %2 = tpu.matmul %0, %1, %cst {dimension_numbers = #tpu.dot_dimension_numbers<[1], [0], [0], [1], [0, 0, 1, 1], [], []>} : vector<8x16xf32>, vector<16x128xf32>, vector<8x128xf32> -> vector<8x128xf32>
    %c0_3 = arith.constant 0 : index
    %c0_4 = arith.constant 0 : index
    %3 = vector.load %arg3[%c0_3, %c0_4] : memref<1x128xf32, #tpu.memory_space<vmem>>, vector<1x128xf32>
    %4 = vector.broadcast %3 : vector<1x128xf32> to vector<8x128xf32>
    %5 = arith.addf %2, %4 : vector<8x128xf32>
    %6 = math.tanh %5 : vector<8x128xf32>
    %c0_5 = arith.constant 0 : index
    %c0_6 = arith.constant 0 : index
    %7 = vector.load %arg4[%c0_5, %c0_6] : memref<128x128xf32, #tpu.memory_space<vmem>>, vector<128x128xf32>
    %cst_7 = arith.constant dense<0.000000e+00> : vector<8x128xf32>
    %8 = tpu.matmul %6, %7, %cst_7 {dimension_numbers = #tpu.dot_dimension_numbers<[1], [0], [0], [1], [0, 0, 1, 1], [], []>} : vector<8x128xf32>, vector<128x128xf32>, vector<8x128xf32> -> vector<8x128xf32>
    %c0_8 = arith.constant 0 : index
    %c0_9 = arith.constant 0 : index
    %9 = vector.load %arg5[%c0_8, %c0_9] : memref<1x128xf32, #tpu.memory_space<vmem>>, vector<1x128xf32>
    %10 = vector.broadcast %9 : vector<1x128xf32> to vector<8x128xf32>
    %11 = arith.addf %8, %10 : vector<8x128xf32>
    %12 = tpu.iota {dimensions = array<i32: 1>} : vector<8x128xi32>
    %c6_i32 = arith.constant 6 : i32
    %13 = vector.broadcast %c6_i32 : i32 to vector<8x128xi32>
    %14 = arith.cmpi slt, %12, %13 : vector<8x128xi32>
    %cst_10 = arith.constant 0xFF800000 : f32
    %15 = vector.broadcast %cst_10 : f32 to vector<8x128xf32>
    %16 = arith.select %14, %11, %15 : vector<8x128xi1>, vector<8x128xf32>
    %cst_11 = arith.constant dense<0xFF800000> : vector<8xf32>
    %17 = vector.multi_reduction <maximumf>, %16, %cst_11 [1] : vector<8x128xf32> to vector<8xf32>
    %18 = vector.shape_cast %17 : vector<8xf32> to vector<8x1xf32>
    %19 = vector.broadcast %18 : vector<8x1xf32> to vector<8x128xf32>
    %20 = arith.subf %11, %19 : vector<8x128xf32>
    %21 = math.exp %20 : vector<8x128xf32>
    %cst_12 = arith.constant 0.000000e+00 : f32
    %22 = vector.broadcast %cst_12 : f32 to vector<8x128xf32>
    %23 = arith.select %14, %21, %22 : vector<8x128xi1>, vector<8x128xf32>
    %cst_13 = arith.constant dense<0.000000e+00> : vector<8xf32>
    %24 = vector.multi_reduction <add>, %23, %cst_13 [1] : vector<8x128xf32> to vector<8xf32>
    %25 = vector.shape_cast %24 : vector<8xf32> to vector<8x1xf32>
    %26 = math.log %25 : vector<8x1xf32>
    %27 = vector.broadcast %26 : vector<8x1xf32> to vector<8x128xf32>
    %28 = arith.subf %20, %27 : vector<8x128xf32>
    %c6_i32_14 = arith.constant 6 : i32
    %29 = vector.broadcast %c6_i32_14 : i32 to vector<8x128xi32>
    %30 = arith.cmpi eq, %12, %29 : vector<8x128xi32>
    %31 = arith.select %30, %11, %28 : vector<8x128xi1>, vector<8x128xf32>
    %c0_15 = arith.constant 0 : index
    %c0_16 = arith.constant 0 : index
    %32 = vector.load %arg6[%c0_15, %c0_16] : memref<8x128xf32, #tpu.memory_space<vmem>>, vector<8x128xf32>
    tpu.vector_store %arg6[%c0_15, %c0_16], %31 {strides = array<i32>} : memref<8x128xf32, #tpu.memory_space<vmem>>, vector<8x128xf32>,
    return
  }
  func.func @transform_0(%arg0: i32) -> (i32, i32) {
    %c0_i32 = arith.constant 0 : i32
    %c0_i32_0 = arith.constant 0 : i32
    return %arg0, %c0_i32 : i32, i32
  }
  func.func @transform_1(%arg0: i32) -> (i32, i32) {
    %c0_i32 = arith.constant 0 : i32
    %c0_i32_0 = arith.constant 0 : i32
    %c0_i32_1 = arith.constant 0 : i32
    return %c0_i32, %c0_i32_0 : i32, i32
  }
  func.func @transform_2(%arg0: i32) -> (i32, i32) {
    %c0_i32 = arith.constant 0 : i32
    %c0_i32_0 = arith.constant 0 : i32
    %c0_i32_1 = arith.constant 0 : i32
    return %c0_i32, %c0_i32_0 : i32, i32
  }
  func.func @transform_3(%arg0: i32) -> (i32, i32) {
    %c0_i32 = arith.constant 0 : i32
    %c0_i32_0 = arith.constant 0 : i32
    %c0_i32_1 = arith.constant 0 : i32
    return %c0_i32, %c0_i32_0 : i32, i32
  }
  func.func @transform_4(%arg0: i32) -> (i32, i32) {
    %c0_i32 = arith.constant 0 : i32
    %c0_i32_0 = arith.constant 0 : i32
    %c0_i32_1 = arith.constant 0 : i32
    return %c0_i32, %c0_i32_0 : i32, i32
  }
  func.func @transform_5(%arg0: i32) -> (i32, i32) {
    %c0_i32 = arith.constant 0 : i32
    %c0_i32_0 = arith.constant 0 : i32
    return %arg0, %c0_i32 : i32, i32
  }
}

</mosaic_0001>

<llo_original>
// kernel: acmodel_forward.1
$region0: #{acmodel_forward.1}
  #allocation0 [shape = 'u32[]', space=smem, size = 0x4, offset = 0x4, fixed_abs, tag = 'smem constant byte address 0x4 - core index']
  #allocation1 [shape = 'u32[72,128]{1,0:T(1,128)}', space=vmem, size = 0x9000, scoped, tag = 'internal scratch']
  %s0 = inlined_call_operand.hbm [shape: f32[8,16], index: 0, kind: input, shape index: {}]
  %s1 = inlined_call_operand.hbm [shape: f32[16,128], index: 1, kind: input, shape index: {}]
  %s2 = inlined_call_operand.hbm [shape: f32[1,128], index: 2, kind: input, shape index: {}]
  %s3 = inlined_call_operand.hbm [shape: f32[128,128], index: 3, kind: input, shape index: {}]
  %s4 = inlined_call_operand.vmem [shape: f32[1,128], index: 4, kind: input, shape index: {}]
  %s5 = inlined_call_operand.vmem [shape: f32[8,128], index: 5, kind: output, shape index: {}]
  %s6 = sld [smem:[#allocation0]]
  $region46: #{acmodel_forward.1} parent=0
    _
  %s8 = ssub.s32 1, %s6
  %s9 = scalar_select 0, %s8, %s6
  $region1: #{acmodel_forward.1} parent=0
    #allocation2 [shape = 'u8[4096]{0}', space=vmem, size = 0x1000, scoped, tag = 'input window, operand 0, single buffered']
    #allocation3 [shape = 's32[1]{0}', space=sflag, size = 0x4, scoped, tag = 'scoped memory for acmodel_forward.1']
    #allocation4 [shape = 'u8[8192]{0}', space=vmem, size = 0x2000, scoped, tag = 'input window, operand 1, single buffered']
    #allocation5 [shape = 's32[1]{0}', space=sflag, size = 0x4, scoped, tag = 'scoped memory for acmodel_forward.1']
    #allocation6 [shape = 'u8[512]{0}', space=vmem, size = 0x400, scoped, tag = 'input window, operand 2, single buffered']
    #allocation7 [shape = 'u8[65536]{0}', space=vmem, size = 0x10000, scoped, tag = 'input window, operand 3, single buffered']
    #allocation8 [shape = 's32[1]{0}', space=sflag, size = 0x4, scoped, tag = 'scoped memory for acmodel_forward.1']
    %10 = vsyncpa [#allocation3], 0
    %11 = vsyncpa [#allocation5], 0
    %12 = vsyncpa [#allocation8], 0
    // Predicated region
    $region2: #{acmodel_forward.1} parent=1 // pred_check
      _
    $region3: #{acmodel_forward.1} parent=1 // pred_check_branch
      %14 = sbr.rel (0) target = $region5
    $region4: #{acmodel_forward.1} parent=1 // pred_region
      %16 = vsyncadd [#allocation3], 0
      %s18 = sshll.u32 %s0, 4
      %s19 = int_to_ptr.hbm [resolvable:$true] %s18
      %s20 = sshll.u32 [#allocation2], 4
      %s21 = int_to_ptr.vmem [resolvable:$true] %s20
      %23 = dma.hbm_to_vmem [thread:$0]  %s19, 128, %s21, [#allocation3]
    $region5: #{acmodel_forward.1} parent=1 // pred_fallthru
      _
    // Predicated region
    $region6: #{acmodel_forward.1} parent=1 // pred_check
      _
    $region7: #{acmodel_forward.1} parent=1 // pred_check_branch
      %25 = sbr.rel (0) target = $region9
    $region8: #{acmodel_forward.1} parent=1 // pred_region
      %27 = vsyncadd [#allocation5], 0
      %s28 = sshll.u32 %s1, 4
      %s29 = int_to_ptr.hbm [resolvable:$true] %s28
      %s30 = sshll.u32 [#allocation4], 4
      %s31 = int_to_ptr.vmem [resolvable:$true] %s30
      %36 = dma.hbm_to_vmem [thread:$0]  %s29, 256, %s31, [#allocation5], 128, 128, 8
    $region9: #{acmodel_forward.1} parent=1 // pred_fallthru
      _
    // Predicated region
    $region10: #{acmodel_forward.1} parent=1 // pred_check
      _
    $region11: #{acmodel_forward.1} parent=1 // pred_check_branch
      %38 = sbr.rel (0) target = $region13
    $region12: #{acmodel_forward.1} parent=1 // pred_region
      %40 = vsyncadd [#allocation5], 0
      %s42 = sshll.u32 %s2, 4
      %s43 = int_to_ptr.hbm [resolvable:$true] %s42
      %s44 = sshll.u32 [#allocation6], 4
      %s45 = int_to_ptr.vmem [resolvable:$true] %s44
      %47 = dma.hbm_to_vmem [thread:$0]  %s43, 16, %s45, [#allocation5]
    $region13: #{acmodel_forward.1} parent=1 // pred_fallthru
      _
    // Predicated region
    $region14: #{acmodel_forward.1} parent=1 // pred_check
      _
    $region15: #{acmodel_forward.1} parent=1 // pred_check_branch
      %49 = sbr.rel (0) target = $region17
    $region16: #{acmodel_forward.1} parent=1 // pred_region
      %51 = vsyncadd [#allocation8], 0
      %s52 = sshll.u32 %s3, 4
      %s53 = int_to_ptr.hbm [resolvable:$true] %s52
      %s54 = sshll.u32 [#allocation7], 4
      %s55 = int_to_ptr.vmem [resolvable:$true] %s54
      %60 = dma.hbm_to_vmem [thread:$0]  %s53, 2048, %s55, [#allocation8], 128, 128, 8
    $region17: #{acmodel_forward.1} parent=1 // pred_fallthru
      _
    // Predicated region
    $region18: #{acmodel_forward.1} parent=1 // pred_check
      _
    $region19: #{acmodel_forward.1} parent=1 // pred_check_branch
      %62 = sbr.rel (0) target = $region21
    $region20: #{acmodel_forward.1} parent=1 // pred_region
      _
    $region21: #{acmodel_forward.1} parent=1 // pred_fallthru
      _
    // Predicated region
    $region22: #{acmodel_forward.1} parent=1 // pred_check
      _
    $region23: #{acmodel_forward.1} parent=1 // pred_check_branch
      %64 = sbr.rel (0) target = $region25
    $region24: #{acmodel_forward.1} parent=1 // pred_region
      %66 = dma.done [#allocation3], 128
    $region25: #{acmodel_forward.1} parent=1 // pred_fallthru
      _
    // Predicated region
    $region26: #{acmodel_forward.1} parent=1 // pred_check
      _
    $region27: #{acmodel_forward.1} parent=1 // pred_check_branch
      %68 = sbr.rel (0) target = $region29
    $region28: #{acmodel_forward.1} parent=1 // pred_region
      %70 = dma.done [#allocation5], 256
    $region29: #{acmodel_forward.1} parent=1 // pred_fallthru
      _
    // Predicated region
    $region30: #{acmodel_forward.1} parent=1 // pred_check
      _
    $region31: #{acmodel_forward.1} parent=1 // pred_check_branch
      %72 = sbr.rel (0) target = $region33
    $region32: #{acmodel_forward.1} parent=1 // pred_region
      %74 = dma.done [#allocation5], 16
    $region33: #{acmodel_forward.1} parent=1 // pred_fallthru
      _
    // Predicated region
    $region34: #{acmodel_forward.1} parent=1 // pred_check
      _
    $region35: #{acmodel_forward.1} parent=1 // pred_check_branch
      %76 = sbr.rel (0) target = $region37
    $region36: #{acmodel_forward.1} parent=1 // pred_region
      %78 = dma.done [#allocation8], 2048
    $region37: #{acmodel_forward.1} parent=1 // pred_fallthru
      _
    %v79 = vld [vmem:[#allocation2] sm:$0xff]
    %v80 = vld [vmem:[#allocation4] sm:$0xff]
    %v81 = vld [vmem:[#allocation4 + $0x8] sm:$0xff]
    %v82 = vld [vmem:[#allocation6] sm:$0x1]
    %v84 = vperm.slane %v82, 0
    %vm86 = vcmask 130048
    %v88 = vsel %vm86, %v79, 0
    %90 = vmatpush.msra.mxu0 0.0
    %91 = vmatpush.msra.mxu0 0.0
    %92 = vmatpush.msra.mxu0 0.0
    %93 = vmatpush.msra.mxu0 0.0
    %94 = vmatpush.msra.mxu0 0.0
    %95 = vmatpush.msra.mxu0 0.0
    %96 = vmatpush.msra.mxu0 0.0
    %97 = vmatpush.msra.mxu0 0.0
    %98 = vmatpush.msra.mxu0 0.0
    %99 = vmatpush.msra.mxu0 0.0
    %100 = vmatpush.msra.mxu0 0.0
    %101 = vmatpush.msra.mxu0 0.0
    %102 = vmatpush.msra.mxu0 0.0
    %103 = vmatpush.msra.mxu0 0.0
    %104 = vmatpush.msra.mxu0 %v81
    %105 = vmatpush.msra.mxu0 %v80
    %106 = vmatmul.f32.gmra.mxu0 %v88
    %v107 = vpop.f32.mrf.mxu0
    %v108 = vadd.f32 %v84, %v107
    %109 = vdwg.mxu0
    %v110 = vtanh.pop %v108
    %v111 = vld [vmem:[#allocation7] sm:$0xff]
    %v112 = vld [vmem:[#allocation7 + $0x8] sm:$0xff]
    %v113 = vld [vmem:[#allocation7 + $0x10] sm:$0xff]
    %v114 = vld [vmem:[#allocation7 + $0x18] sm:$0xff]
    %v115 = vld [vmem:[#allocation7 + $0x20] sm:$0xff]
    %v116 = vld [vmem:[#allocation7 + $0x28] sm:$0xff]
    %v117 = vld [vmem:[#allocation7 + $0x30] sm:$0xff]
    %v118 = vld [vmem:[#allocation7 + $0x38] sm:$0xff]
    %v119 = vld [vmem:[#allocation7 + $0x40] sm:$0xff]
    %v120 = vld [vmem:[#allocation7 + $0x48] sm:$0xff]
    %v121 = vld [vmem:[#allocation7 + $0x50] sm:$0xff]
    %v122 = vld [vmem:[#allocation7 + $0x58] sm:$0xff]
    %v123 = vld [vmem:[#allocation7 + $0x60] sm:$0xff]
    %v124 = vld [vmem:[#allocation7 + $0x68] sm:$0xff]
    %v125 = vld [vmem:[#allocation7 + $0x70] sm:$0xff]
    %v126 = vld [vmem:[#allocation7 + $0x78] sm:$0xff]
    %v127 = vld [vmem:[%s4] sm:$0x1]
    %v129 = vperm.slane %v127, 0
    %131 = vmatpush.msra.mxu0 %v126
    %132 = vmatpush.msra.mxu0 %v125
    %133 = vmatpush.msra.mxu0 %v124
    %134 = vmatpush.msra.mxu0 %v123
    %135 = vmatpush.msra.mxu0 %v122
    %136 = vmatpush.msra.mxu0 %v121
    %137 = vmatpush.msra.mxu0 %v120
    %138 = vmatpush.msra.mxu0 %v119
    %139 = vmatpush.msra.mxu0 %v118
    %140 = vmatpush.msra.mxu0 %v117
    %141 = vmatpush.msra.mxu0 %v116
    %142 = vmatpush.msra.mxu0 %v115
    %143 = vmatpush.msra.mxu0 %v114
    %144 = vmatpush.msra.mxu0 %v113
    %145 = vmatpush.msra.mxu0 %v112
    %146 = vmatpush.msra.mxu0 %v111
    %147 = vmatmul.f32.gmra.mxu0 %v110
    %v148 = vpop.f32.mrf.mxu0
    %v149 = vadd.f32 %v129, %v148
    %150 = vdwg.mxu0
    %v151 = vlaneseq
    %v152 = vand.u32 %v151, 127
    %vm153 = vcmp.lt.s32.totalorder %v152, 6
    %v154 = vsel %vm153, %v149, -inf
    %155 = vmax.xlane.f32.xlu0 %v154
    %v156 = vpop.xlane.xlu0 %155
    %v157 = vsub.f32 %v149, %v156
    %v158 = vmul.f32 %v157, 1.442695
    %v159 = vpow.pop %v158
    %v160 = vsel %vm153, %v159, 0.0
    %161 = vadd.xlane.f32.xlu0 %v160
    %v162 = vpop.xlane.xlu0 %161
    %v163 = vlog2.pop %v162
    %v164 = vmul.f32 %v163, 0.6931472
    %v165 = vsub.f32 %v157, %v164
    %vm166 = vcmp.eq.s32.totalorder %v152, 6
    %v167 = vsel %vm166, %v149, %v165
    %168 = vst [vmem:[%s5] sm:$0xff] %v167
    // Predicated region
    $region38: #{acmodel_forward.1} parent=1 // pred_check
      _
    $region39: #{acmodel_forward.1} parent=1 // pred_check_branch
      %170 = sbr.rel (0) target = $region41
    $region40: #{acmodel_forward.1} parent=1 // pred_region
      _
    $region41: #{acmodel_forward.1} parent=1 // pred_fallthru
      _
    // Predicated region
    $region42: #{acmodel_forward.1} parent=1 // pred_check
      _
    $region43: #{acmodel_forward.1} parent=1 // pred_check_branch
      %172 = sbr.rel (0) target = $region45
    $region44: #{acmodel_forward.1} parent=1 // pred_region
      _
    $region45: #{acmodel_forward.1} parent=1 // pred_fallthru
      _
    %173 = vsyncpa [#allocation3], 1
    %174 = vsyncpa [#allocation5], 1
    %175 = vsyncpa [#allocation8], 1

</llo_original>
